<compile_context>
chip_gen: v5e
topology: v5e:2x2
jax: 0.10.0
libtpu: 0.0.40
codegen_flags: <defaults>
</compile_context>

<pallas_src>
import functools

import jax
import jax.numpy as jnp
from jax import lax
from jax.experimental import pallas as pl
from jax.experimental.pallas import tpu as pltpu


# --------------------------------------------------------------------------
# VMEM budget / tiling helpers (generation aware).
# --------------------------------------------------------------------------
def _vmem_budget_bytes():
    try:
        cap = pltpu.get_tpu_info().vmem_capacity_bytes
    except Exception:            # interpret mode / older jax: assume 64 MiB
        cap = 64 * 1024 * 1024
    # 96 MiB on 128-MiB parts (v5e/v6e), 48 MiB on 64-MiB parts (v7x).
    return int(max(32 * 1024 * 1024, min(96 * 1024 * 1024, (cap * 3) // 4)))


def _row_tile(n, cap):
    """Largest divisor of n that is <= cap and a multiple of 8, else n (full
    block == full dim is always a legal BlockSpec)."""
    best = None
    for t in range(8, min(n, cap) + 1, 8):
        if n % t == 0:
            best = t
    return best if best is not None else n


def _group_images(batch, samples, cap):
    """Largest g dividing batch with g*samples <= cap and (g*samples) % 8 == 0."""
    best = None
    for g in range(1, batch + 1):
        if batch % g:
            continue
        tm = g * samples
        if tm <= cap and tm % 8 == 0:
            best = g
    return best if best is not None else batch


def _col_tile(n, cap=2048):
    """Column tile for transposed output blocks: full dim, or a 128-multiple."""
    if n <= cap:
        return n
    best = None
    for t in range(128, cap + 1, 128):
        if n % t == 0:
            best = t
    return best        # None -> caller falls back to a wrapper transpose


# --------------------------------------------------------------------------
# Predictor: Linear -> BatchNorm1d (training batch stats) -> ReLU -> Linear.
# Pass 1 computes h (bf16) + per-block BN partial sums; pass 2 applies the
# folded BN affine, ReLU, Linear-2 and (optionally) a fused L2-normalize.
# --------------------------------------------------------------------------
def _pred_hidden_kernel(x_ref, w1_ref, h_ref, s1_ref, s2_ref):
    x = x_ref[...].astype(jnp.bfloat16)
    h = jnp.dot(x, w1_ref[...], preferred_element_type=jnp.float32)
    # Linear-1 bias is skipped on purpose: training-mode BatchNorm subtracts
    # the batch mean right after, so a constant per-feature shift cancels.
    h_ref[...] = h.astype(h_ref.dtype)                     # bf16 HBM round-trip
    s1_ref[...] = jnp.sum(h, axis=0, keepdims=True).reshape(s1_ref.shape)
    s2_ref[...] = jnp.sum(h * h, axis=0, keepdims=True).reshape(s2_ref.shape)


def _pred_out_kernel(h_ref, s1_ref, s2_ref, gamma_ref, beta_ref, w2_ref,
                     b2_ref, o_ref, *, n_rows, eps, normalize, out_scale):
    inv_n = 1.0 / n_rows
    mean = s1_ref[...] * inv_n
    var = s2_ref[...] * inv_n - mean * mean                # biased batch variance
    scale = gamma_ref[...] * lax.rsqrt(var + eps)          # folded BN affine
    shift = beta_ref[...] - scale * mean
    h = jnp.maximum(h_ref[...].astype(jnp.float32) * scale + shift, 0.0)
    o = (jnp.dot(h.astype(jnp.bfloat16), w2_ref[...],
                 preferred_element_type=jnp.float32) + b2_ref[...])
    if normalize:
        # Fused F.normalize(dim=-1) + 1/temperature folding, bf16 output.
        ssq = jnp.sum(o * o, axis=-1, keepdims=True)
        o = o * (lax.rsqrt(jnp.maximum(ssq, 1e-24)) * out_scale)
    o_ref[...] = o.astype(o_ref.dtype)


def predictor_forward(x, params, normalize_output=False, out_scale=1.0):
    # TODO(synk): BatchNorm running_mean/running_var buffer updates (in-place
    # module state) are not replicated; only the training-mode forward runs.
    n, cin = x.shape
    hid = params["w1"].shape[1]
    out = params["w2"].shape[1]
    budget = _vmem_budget_bytes()
    tm = _row_tile(n, 512)
    nb = n // tm
    w1 = params["w1"].astype(jnp.bfloat16)
    w2 = params["w2"].astype(jnp.bfloat16)
    cparams = pltpu.CompilerParams(dimension_semantics=("parallel",),
                                   vmem_limit_bytes=budget)

    # Pass 1: hidden pre-activations + per-block BN partial sums ("parallel").
    h, s1p, s2p = pl.pallas_call(
        _pred_hidden_kernel,
        out_shape=(
            jax.ShapeDtypeStruct((n, hid), jnp.bfloat16),
            jax.ShapeDtypeStruct((nb, 1, hid), jnp.float32),
            jax.ShapeDtypeStruct((nb, 1, hid), jnp.float32),
        ),
        grid=(nb,),
        in_specs=[
            pl.BlockSpec((tm, cin), lambda i: (i, 0)),
            pl.BlockSpec((cin, hid), lambda i: (0, 0)),
        ],
        out_specs=(
            pl.BlockSpec((tm, hid), lambda i: (i, 0)),
            pl.BlockSpec((1, 1, hid), lambda i: (i, 0, 0)),
            pl.BlockSpec((1, 1, hid), lambda i: (i, 0, 0)),
        ),
        compiler_params=cparams,
    )(x, w1)
    s1 = jnp.sum(s1p, axis=0)          # (1, hid) tiny XLA reductions
    s2 = jnp.sum(s2p, axis=0)

    # Pass 2: folded BN affine + ReLU + Linear-2 (+ fused normalize / scale).
    kernel = functools.partial(_pred_out_kernel, n_rows=n, eps=1e-5,
                               normalize=normalize_output, out_scale=out_scale)
    out_dtype = jnp.bfloat16 if normalize_output else jnp.float32
    return pl.pallas_call(
        kernel,
        out_shape=jax.ShapeDtypeStruct((n, out), out_dtype),
        grid=(nb,),
        in_specs=[
            pl.BlockSpec((tm, hid), lambda i: (i, 0)),
            pl.BlockSpec((1, hid), lambda i: (0, 0)),
            pl.BlockSpec((1, hid), lambda i: (0, 0)),
            pl.BlockSpec((1, hid), lambda i: (0, 0)),
            pl.BlockSpec((1, hid), lambda i: (0, 0)),
            pl.BlockSpec((hid, out), lambda i: (0, 0)),
            pl.BlockSpec((1, out), lambda i: (0, 0)),
        ],
        out_specs=pl.BlockSpec((tm, out), lambda i: (i, 0)),
        compiler_params=cparams,
    )(h, s1, s2, params["gamma"], params["beta"], w2, params["b2"])


# --------------------------------------------------------------------------
# Row L2-normalize (F.normalize, eps=1e-12) + optional scale + bf16 cast.
# With transpose_out=True the (D, N) transposed layout is written directly
# (per-tile XLU transpose hides under the output DMA; no extra HBM pass).
# --------------------------------------------------------------------------
def _l2norm_bf16_kernel(x_ref, o_ref, *, scale, transpose_out):
    x = x_ref[...].astype(jnp.float32)
    ssq = jnp.sum(x * x, axis=-1, keepdims=True)
    y = x * (lax.rsqrt(jnp.maximum(ssq, 1e-24)) * scale)
    if transpose_out:
        y = jnp.transpose(y)
    o_ref[...] = y.astype(o_ref.dtype)


def _l2_normalize_bf16(x, scale=1.0, transpose_out=False):
    n, d = x.shape
    budget = _vmem_budget_bytes()
    if transpose_out:
        tm = _col_tile(n)
        if tm is None:     # no aligned column tile -> wrapper-side transpose
            return jnp.transpose(_l2_normalize_bf16(x, scale, False))
        out_shape = jax.ShapeDtypeStruct((d, n), jnp.bfloat16)
        out_spec = pl.BlockSpec((d, tm), lambda i: (0, i))
    else:
        tm = _row_tile(n, 512)
        out_shape = jax.ShapeDtypeStruct((n, d), jnp.bfloat16)
        out_spec = pl.BlockSpec((tm, d), lambda i: (i, 0))
    kernel = functools.partial(_l2norm_bf16_kernel, scale=scale,
                               transpose_out=transpose_out)
    return pl.pallas_call(
        kernel,
        out_shape=out_shape,
        grid=(n // tm,),
        in_specs=[pl.BlockSpec((tm, d), lambda i: (i, 0))],
        out_specs=out_spec,
        compiler_params=pltpu.CompilerParams(
            dimension_semantics=("parallel",), vmem_limit_bytes=budget),
    )(x)


# --------------------------------------------------------------------------
# DetCon loss kernel (single-device path of DetConLoss / byol_nce_detcon).
# Tiled over row blocks (whole images per step); emits per-row CE values.
# Expects p1/p2 already L2-normalized and scaled by 1/temperature (bf16);
# targets arrive resident as (D, BS) bf16 normalized.
# --------------------------------------------------------------------------
def _detcon_loss_kernel(p1_ref, p2_ref, t1t_ref, t2t_ref,
                        pind1_ref, pind2_ref,
                        p1row_ref, p2row_ref, t1row_ref, t2row_ref,
                        ce_ref, *, num_samples, group, total_rows):
    i = pl.program_id(0)
    S = num_samples
    TM = group * S
    BS = total_rows
    f32 = jnp.float32
    inf_proxy = 1e9
    one = jnp.float32(1.0)
    zero = jnp.float32(0.0)

    # Stack [p1; p2] into one (2*TM, D) LHS -> two MXU calls instead of four.
    p = jnp.concatenate([p1_ref[...], p2_ref[...]], axis=0)
    dn = (((1,), (0,)), ((), ()))        # contract leading RHS dim (D, BS)
    l1 = lax.dot_general(p, t1t_ref[...], dn, preferred_element_type=f32)
    l2 = lax.dot_general(p, t2t_ref[...], dn, preferred_element_type=f32)
    l_aa, l_ba = l1[:TM], l1[TM:]        # p1.t1, p2.t1   (TM, BS) each
    l_ab, l_bb = l2[:TM], l2[TM:]        # p1.t2, p2.t2

    # Block-diagonal "same image" mask from 1-D iotas (broadcast compare).
    row_img = i * group + lax.broadcasted_iota(jnp.int32, (TM, 1), 0) // S
    col_img = lax.broadcasted_iota(jnp.int32, (1, BS), 1) // S
    in_diag = row_img == col_img                          # (TM, BS) bool

    pind1 = pind1_ref[...]               # (TM, 1) int32
    pind2 = pind2_ref[...]
    p1row = p1row_ref[...]               # (1, BS) int32
    p2row = p2row_ref[...]
    t1row = t1row_ref[...]
    t2row = t2row_ref[...]

    same_ab = in_diag & (pind1 == t2row)                  # positives, loss_a
    same_ba = in_diag & (pind2 == t1row)                  # positives, loss_b

    # Mask "same object" self logits (aa / bb) on the diagonal block only
    # (reference: logits -= 1e9 * labels_local * same_obj; /T already folded).
    l_aa = jnp.where(in_diag & (pind1 == t1row), l_aa - inf_proxy, l_aa)
    l_bb = jnp.where(in_diag & (pind2 == t2row), l_bb - inf_proxy, l_bb)

    num_pos_0 = jnp.sum(jnp.where(same_ab, one, zero), axis=-1, keepdims=True)
    num_pos_1 = jnp.sum(jnp.where(same_ba, one, zero), axis=-1, keepdims=True)
    obj_area_0 = jnp.sum(jnp.where(in_diag & (pind1 == p1row), one, zero),
                         axis=-1, keepdims=True)
    obj_area_1 = jnp.sum(jnp.where(in_diag & (pind2 == p2row), one, zero),
                         axis=-1, keepdims=True)
    wgt0 = jnp.where(num_pos_0 > 1e-3, 1.0, 0.0) / obj_area_0
    wgt1 = jnp.where(num_pos_1 > 1e-3, 1.0, 0.0) / obj_area_1

    def weighted_ce(l_pos, l_neg, same_pos, num_pos, w):
        # log-softmax over the implicit concat [l_pos, l_neg]; normalized
        # labels live only on l_pos's diagonal block.
        m = jnp.maximum(jnp.max(l_pos, axis=-1, keepdims=True),
                        jnp.max(l_neg, axis=-1, keepdims=True))
        se = (jnp.sum(jnp.exp(l_pos - m), axis=-1, keepdims=True)
              + jnp.sum(jnp.exp(l_neg - m), axis=-1, keepdims=True))
        lse = m + jnp.log(se)
        pos = jnp.sum(jnp.where(same_pos, l_pos, zero), axis=-1, keepdims=True)
        return -w * (pos - num_pos * lse) / jnp.maximum(num_pos, 1.0)

    ce_ref[...] = (weighted_ce(l_ab, l_aa, same_ab, num_pos_0, wgt0)
                   + weighted_ce(l_ba, l_bb, same_ba, num_pos_1, wgt1))


def detcon_loss(pred1, pred2, target1, target2, pind1, pind2, tind1, tind2,
                temperature=0.1, preds_prenormalized=False):
    B, S, D = pred1.shape
    BS = B * S
    f32, i32 = jnp.float32, jnp.int32
    inv_t = 1.0 / temperature
    budget = _vmem_budget_bytes()

    p1 = pred1.reshape(BS, D)
    p2 = pred2.reshape(BS, D)
    if preds_prenormalized:
        p1 = p1.astype(jnp.bfloat16)
        p2 = p2.astype(jnp.bfloat16)
    else:
        p1 = _l2_normalize_bf16(p1.astype(f32), scale=inv_t)
        p2 = _l2_normalize_bf16(p2.astype(f32), scale=inv_t)

    # Targets: normalize + bf16, written directly in (D, BS) transposed layout
    # so the MXU contracts the leading RHS dim; resident across the grid.
    t1t = _l2_normalize_bf16(target1.reshape(BS, D).astype(f32), transpose_out=True)
    t2t = _l2_normalize_bf16(target2.reshape(BS, D).astype(f32), transpose_out=True)

    pind1c = pind1.reshape(BS, 1).astype(i32)
    pind2c = pind2.reshape(BS, 1).astype(i32)
    p1row = pind1.reshape(1, BS).astype(i32)
    p2row = pind2.reshape(1, BS).astype(i32)
    t1row = tind1.reshape(1, BS).astype(i32)
    t2row = tind2.reshape(1, BS).astype(i32)

    # Row-tile cap per VMEM budget (larger on v5e/v6e, conservative on v7x).
    cap = 512 if budget >= 64 * 1024 * 1024 else 256
    group = _group_images(B, S, cap)
    tm = group * S
    nb = B // group

    kernel = functools.partial(_detcon_loss_kernel, num_samples=S, group=group,
                               total_rows=BS)
    row_spec = pl.BlockSpec((tm, D), lambda i: (i, 0))
    col_spec = pl.BlockSpec((tm, 1), lambda i: (i, 0))
    full_row = pl.BlockSpec((1, BS), lambda i: (0, 0))
    tgt_spec = pl.BlockSpec((D, BS), lambda i: (0, 0))    # resident across grid

    ce = pl.pallas_call(
        kernel,
        out_shape=jax.ShapeDtypeStruct((BS, 1), jnp.float32),
        grid=(nb,),
        in_specs=[row_spec, row_spec, tgt_spec, tgt_spec,
                  col_spec, col_spec,
                  full_row, full_row, full_row, full_row],
        out_specs=pl.BlockSpec((tm, 1), lambda i: (i, 0)),
        compiler_params=pltpu.CompilerParams(
            dimension_semantics=("parallel",),
            vmem_limit_bytes=budget),
    )(p1, p2, t1t, t2t, pind1c, pind2c, p1row, p2row, t1row, t2row)
    # loss = mean(ce_a) + mean(ce_b) over B*S rows == sum(per-row ce) / BS.
    return jnp.sum(ce) / BS


# --------------------------------------------------------------------------
# DetConHead forward (glue: reshapes / splits exactly as in the PyTorch code).
# --------------------------------------------------------------------------
def detcon_head_forward(params, projs, projs_tgt, ids, ids_tgt,
                        batch_size, num_samples, temperature=0.1):
    # Predictor with fused output L2-normalize + 1/temperature scale (bf16).
    preds = predictor_forward(projs, params, normalize_output=True,
                              out_scale=1.0 / temperature)
    preds = preds.reshape(-1, num_samples, preds.shape[-1])       # (2B, S, O)
    pred1, pred2 = preds[:batch_size], preds[batch_size:2 * batch_size]
    id1, id2 = ids[:batch_size], ids[batch_size:2 * batch_size]
    tgt = projs_tgt.reshape(-1, num_samples, projs_tgt.shape[-1])
    proj1_tgt, proj2_tgt = tgt[:batch_size], tgt[batch_size:2 * batch_size]
    id1_tgt, id2_tgt = ids_tgt[:batch_size], ids_tgt[batch_size:2 * batch_size]
    # TODO(synk): distributed all_gather branch of DetConLoss (cross-replica
    # negatives) is not implemented; this is the single-device path.
    loss = detcon_loss(pred1, pred2, proj1_tgt, proj2_tgt,
                       id1, id2, id1_tgt, id2_tgt,
                       temperature=temperature, preds_prenormalized=True)
    return {"loss": loss}


def init_predictor_params(key, cin, hid, out):
    k1, k2, k3, k4 = jax.random.split(key, 4)
    return {
        "w1": (jax.random.normal(k1, (cin, hid), jnp.float32) * (1.0 / cin ** 0.5)),
        # b1 kept for parameter parity; mathematically cancelled by the
        # training-mode BatchNorm mean subtraction (not applied in-kernel).
        "b1": (jax.random.normal(k2, (1, hid), jnp.float32) * 0.01),
        "gamma": jnp.ones((1, hid), jnp.float32),
        "beta": jnp.zeros((1, hid), jnp.float32),
        "w2": (jax.random.normal(k3, (hid, out), jnp.float32) * (1.0 / hid ** 0.5)),
        "b2": (jax.random.normal(k4, (1, out), jnp.float32) * 0.01),
    }


if __name__ == "__main__":
    # Small but lane-dense shapes (feature widths multiples of 128).
    B, S = 8, 16           # batch_size per view, num_samples (rois per image)
    CIN, HID, OUT = 128, 256, 128
    N = 2 * B * S          # concatenated features from both views

    key = jax.random.PRNGKey(0)
    ks = jax.random.split(key, 5)
    projs = jax.random.normal(ks[0], (N, CIN), jnp.float32)
    projs_tgt = jax.random.normal(ks[1], (N, OUT), jnp.float32)
    ids = jax.random.randint(ks[2], (2 * B, S), 0, S, dtype=jnp.int32)
    ids_tgt = jax.random.randint(ks[3], (2 * B, S), 0, S, dtype=jnp.int32)
    params = init_predictor_params(ks[4], CIN, HID, OUT)

    out = detcon_head_forward(params, projs, projs_tgt, ids, ids_tgt,
                              batch_size=B, num_samples=S)
    loss = jax.block_until_ready(out["loss"])
    assert loss.shape == () and bool(jnp.isfinite(loss))
    print("KERNEL_OK")
</pallas_src>

<mosaic_0001>
module attributes {stable_mosaic.version = 11 : i64} {
  func.func @_pred_hidden_kernel(%arg0: i32, %arg1: memref<256x128xf32, #tpu.memory_space<vmem>>, %arg2: memref<128x256xbf16, #tpu.memory_space<vmem>>, %arg3: memref<256x256xbf16, #tpu.memory_space<vmem>>, %arg4: memref<1x1x256xf32, #tpu.memory_space<vmem>>, %arg5: memref<1x1x256xf32, #tpu.memory_space<vmem>>) attributes {dimension_semantics = [#tpu.dimension_semantics<parallel>], iteration_bounds = array<i64: 1>, scalar_prefetch = 0 : i64, scratch_operands = 0 : i64, tpu.core_type = #tpu.core_type<tc>, window_params = [{transform_indices = @transform_0, window_bounds = array<i64: 256, 128>}, {pipeline_mode = #tpu.pipeline_mode<synchronous>, transform_indices = @transform_1, window_bounds = array<i64: 128, 256>}, {transform_indices = @transform_2, window_bounds = array<i64: 256, 256>}, {transform_indices = @transform_3, window_bounds = array<i64: 1, 1, 256>}, {transform_indices = @transform_4, window_bounds = array<i64: 1, 1, 256>}]} {
    %c0 = arith.constant 0 : index
    %c0_0 = arith.constant 0 : index
    %0 = vector.load %arg1[%c0, %c0_0] : memref<256x128xf32, #tpu.memory_space<vmem>>, vector<256x128xf32>
    %1 = arith.truncf %0 : vector<256x128xf32> to vector<256x128xbf16>
    %c0_1 = arith.constant 0 : index
    %c0_2 = arith.constant 0 : index
    %2 = vector.load %arg2[%c0_1, %c0_2] : memref<128x256xbf16, #tpu.memory_space<vmem>>, vector<128x256xbf16>
    %cst = arith.constant dense<0.000000e+00> : vector<256x256xf32>
    %3 = tpu.matmul %1, %2, %cst {dimension_numbers = #tpu.dot_dimension_numbers<[1], [0], [0], [1], [0, 0, 1, 1], [], []>} : vector<256x128xbf16>, vector<128x256xbf16>, vector<256x256xf32> -> vector<256x256xf32>
    %4 = arith.truncf %3 : vector<256x256xf32> to vector<256x256xbf16>
    %c0_3 = arith.constant 0 : index
    %c0_4 = arith.constant 0 : index
    %5 = vector.load %arg3[%c0_3, %c0_4] : memref<256x256xbf16, #tpu.memory_space<vmem>>, vector<256x256xbf16>
    tpu.vector_store %arg3[%c0_3, %c0_4], %4 {strides = array<i32>} : memref<256x256xbf16, #tpu.memory_space<vmem>>, vector<256x256xbf16>,
    %cst_5 = arith.constant dense<0.000000e+00> : vector<256xf32>
    %6 = vector.multi_reduction <add>, %3, %cst_5 [0] : vector<256x256xf32> to vector<256xf32>
    %7 = vector.shape_cast %6 : vector<256xf32> to vector<1x256xf32>
    %8 = vector.shape_cast %7 : vector<1x256xf32> to vector<1x1x256xf32>
    %c0_6 = arith.constant 0 : index
    %c0_7 = arith.constant 0 : index
    %c0_8 = arith.constant 0 : index
    %9 = vector.load %arg4[%c0_6, %c0_7, %c0_8] : memref<1x1x256xf32, #tpu.memory_space<vmem>>, vector<1x1x256xf32>
    tpu.vector_store %arg4[%c0_6, %c0_7, %c0_8], %8 {strides = array<i32>} : memref<1x1x256xf32, #tpu.memory_space<vmem>>, vector<1x1x256xf32>,
    %10 = arith.mulf %3, %3 : vector<256x256xf32>
    %cst_9 = arith.constant dense<0.000000e+00> : vector<256xf32>
    %11 = vector.multi_reduction <add>, %10, %cst_9 [0] : vector<256x256xf32> to vector<256xf32>
    %12 = vector.shape_cast %11 : vector<256xf32> to vector<1x256xf32>
    %13 = vector.shape_cast %12 : vector<1x256xf32> to vector<1x1x256xf32>
    %c0_10 = arith.constant 0 : index
    %c0_11 = arith.constant 0 : index
    %c0_12 = arith.constant 0 : index
    %14 = vector.load %arg5[%c0_10, %c0_11, %c0_12] : memref<1x1x256xf32, #tpu.memory_space<vmem>>, vector<1x1x256xf32>
    tpu.vector_store %arg5[%c0_10, %c0_11, %c0_12], %13 {strides = array<i32>} : memref<1x1x256xf32, #tpu.memory_space<vmem>>, vector<1x1x256xf32>,
    return
  }
  func.func @transform_0(%arg0: i32) -> (i32, i32) {
    %c0_i32 = arith.constant 0 : i32
    %c0_i32_0 = arith.constant 0 : i32
    return %arg0, %c0_i32 : i32, i32
  }
  func.func @transform_1(%arg0: i32) -> (i32, i32) {
    %c0_i32 = arith.constant 0 : i32
    %c0_i32_0 = arith.constant 0 : i32
    %c0_i32_1 = arith.constant 0 : i32
    return %c0_i32, %c0_i32_0 : i32, i32
  }
  func.func @transform_2(%arg0: i32) -> (i32, i32) {
    %c0_i32 = arith.constant 0 : i32
    %c0_i32_0 = arith.constant 0 : i32
    return %arg0, %c0_i32 : i32, i32
  }
  func.func @transform_3(%arg0: i32) -> (i32, i32, i32) {
    %c0_i32 = arith.constant 0 : i32
    %c0_i32_0 = arith.constant 0 : i32
    %c0_i32_1 = arith.constant 0 : i32
    return %arg0, %c0_i32, %c0_i32_0 : i32, i32, i32
  }
  func.func @transform_4(%arg0: i32) -> (i32, i32, i32) {
    %c0_i32 = arith.constant 0 : i32
    %c0_i32_0 = arith.constant 0 : i32
    %c0_i32_1 = arith.constant 0 : i32
    return %arg0, %c0_i32, %c0_i32_0 : i32, i32, i32
  }
}

</mosaic_0001>

<llo_original>
// kernel: tpu_custom_call.1
$region0: #{tpu_custom_call.1}
  #allocation0 [shape = 'u32[]', space=smem, size = 0x4, offset = 0x4, fixed_abs, tag = 'smem constant byte address 0x4 - core index']
  #allocation1 [shape = 'u32[72,128]{1,0:T(1,128)}', space=vmem, size = 0x9000, scoped, tag = 'internal scratch']
  %s0 = inlined_call_operand.hbm [shape: f32[256,128], index: 0, kind: input, shape index: {}]
  %s1 = inlined_call_operand.hbm [shape: bf16[128,256], index: 1, kind: input, shape index: {}]
  %s2 = inlined_call_operand.hbm [shape: bf16[256,256], index: 2, kind: output, shape index: {0}]
  %s3 = inlined_call_operand.hbm [shape: f32[1,1,256], index: 3, kind: output, shape index: {1}]
  %s4 = inlined_call_operand.hbm [shape: f32[1,1,256], index: 4, kind: output, shape index: {2}]
  %5 = xla_tuple %s2, %s3, %s4
  %s6 = sld [smem:[#allocation0]]
  $region42: #{tpu_custom_call.1} parent=0
    _
  %s8 = ssub.s32 1, %s6
  %s9 = scalar_select 0, %s8, %s6
  $region1: #{tpu_custom_call.1} parent=0
    #allocation2 [shape = 'u8[131072]{0}', space=vmem, size = 0x20000, scoped, tag = 'input window, operand 0, single buffered']
    #allocation3 [shape = 's32[1]{0}', space=sflag, size = 0x4, scoped, tag = 'scoped memory for tpu_custom_call.1']
    #allocation4 [shape = 's32[1]{0}', space=sflag, size = 0x4, scoped, tag = 'scoped memory for tpu_custom_call.1']
    #allocation5 [shape = 'u8[65536]{0}', space=vmem, size = 0x10000, scoped, tag = 'input window, operand 1, single buffered']
    #allocation6 [shape = 's32[1]{0}', space=sflag, size = 0x4, scoped, tag = 'scoped memory for tpu_custom_call.1']
    #allocation7 [shape = 'u8[131072]{0}', space=vmem, size = 0x20000, scoped, tag = 'output window, operand 0, single buffered']
    #allocation8 [shape = 'u8[1024]{0}', space=vmem, size = 0x400, scoped, tag = 'output window, operand 1, single buffered']
    #allocation9 [shape = 's32[1]{0}', space=sflag, size = 0x4, scoped, tag = 'scoped memory for tpu_custom_call.1']
    #allocation10 [shape = 'u8[1024]{0}', space=vmem, size = 0x400, scoped, tag = 'output window, operand 2, single buffered']
    %10 = vsyncpa [#allocation3], 0
    %11 = vsyncpa [#allocation6], 0
    %12 = vsyncpa [#allocation4], 0
    %13 = vsyncpa [#allocation9], 0
    // Predicated region
    $region2: #{tpu_custom_call.1} parent=1 // pred_check
      _
    $region3: #{tpu_custom_call.1} parent=1 // pred_check_branch
      %15 = sbr.rel (0) target = $region5
    $region4: #{tpu_custom_call.1} parent=1 // pred_region
      %17 = vsyncadd [#allocation3], 0
      %s18 = sshll.u32 %s0, 4
      %s19 = int_to_ptr.hbm [resolvable:$true] %s18
      %s20 = sshll.u32 [#allocation2], 4
      %s21 = int_to_ptr.vmem [resolvable:$true] %s20
      %26 = dma.hbm_to_vmem [thread:$0]  %s19, 4096, %s21, [#allocation3], 128, 128, 8
    $region5: #{tpu_custom_call.1} parent=1 // pred_fallthru
      _
    // Predicated region
    $region6: #{tpu_custom_call.1} parent=1 // pred_check
      _
    $region7: #{tpu_custom_call.1} parent=1 // pred_check_branch
      %28 = sbr.rel (0) target = $region9
    $region8: #{tpu_custom_call.1} parent=1 // pred_region
      %30 = vsyncadd [#allocation6], 0
      %s31 = sshll.u32 %s1, 4
      %s32 = int_to_ptr.hbm [resolvable:$true] %s31
      %s33 = sshll.u32 [#allocation5], 4
      %s34 = int_to_ptr.vmem [resolvable:$true] %s33
      %39 = dma.hbm_to_vmem [thread:$0]  %s32, 2048, %s34, [#allocation6], 128, 128, 8
    $region9: #{tpu_custom_call.1} parent=1 // pred_fallthru
      _
    // Predicated region
    $region10: #{tpu_custom_call.1} parent=1 // pred_check
      _
    $region11: #{tpu_custom_call.1} parent=1 // pred_check_branch
      %41 = sbr.rel (0) target = $region13
    $region12: #{tpu_custom_call.1} parent=1 // pred_region
      %43 = dma.done [#allocation3], 4096
    $region13: #{tpu_custom_call.1} parent=1 // pred_fallthru
      _
    // Predicated region
    $region14: #{tpu_custom_call.1} parent=1 // pred_check
      _
    $region15: #{tpu_custom_call.1} parent=1 // pred_check_branch
      %45 = sbr.rel (0) target = $region17
    $region16: #{tpu_custom_call.1} parent=1 // pred_region
      %47 = dma.done [#allocation6], 2048
    $region17: #{tpu_custom_call.1} parent=1 // pred_fallthru
      _
    %v48 = vld [vmem:[#allocation2] sm:$0xff]
    %v49 = vld [vmem:[#allocation2 + $0x8] sm:$0xff]
    %v50 = vld [vmem:[#allocation2 + $0x10] sm:$0xff]
    %v51 = vld [vmem:[#allocation2 + $0x18] sm:$0xff]
    %v52 = vld [vmem:[#allocation2 + $0x20] sm:$0xff]
    %v53 = vld [vmem:[#allocation2 + $0x28] sm:$0xff]
    %v54 = vld [vmem:[#allocation2 + $0x30] sm:$0xff]
    %v55 = vld [vmem:[#allocation2 + $0x38] sm:$0xff]
    %v56 = vld [vmem:[#allocation2 + $0x40] sm:$0xff]
    %v57 = vld [vmem:[#allocation2 + $0x48] sm:$0xff]
    %v58 = vld [vmem:[#allocation2 + $0x50] sm:$0xff]
    %v59 = vld [vmem:[#allocation2 + $0x58] sm:$0xff]
    %v60 = vld [vmem:[#allocation2 + $0x60] sm:$0xff]
    %v61 = vld [vmem:[#allocation2 + $0x68] sm:$0xff]
    %v62 = vld [vmem:[#allocation2 + $0x70] sm:$0xff]
    %v63 = vld [vmem:[#allocation2 + $0x78] sm:$0xff]
    %v64 = vld [vmem:[#allocation2 + $0x80] sm:$0xff]
    %v65 = vld [vmem:[#allocation2 + $0x88] sm:$0xff]
    %v66 = vld [vmem:[#allocation2 + $0x90] sm:$0xff]
    %v67 = vld [vmem:[#allocation2 + $0x98] sm:$0xff]
    %v68 = vld [vmem:[#allocation2 + $0xa0] sm:$0xff]
    %v69 = vld [vmem:[#allocation2 + $0xa8] sm:$0xff]
    %v70 = vld [vmem:[#allocation2 + $0xb0] sm:$0xff]
    %v71 = vld [vmem:[#allocation2 + $0xb8] sm:$0xff]
    %v72 = vld [vmem:[#allocation2 + $0xc0] sm:$0xff]
    %v73 = vld [vmem:[#allocation2 + $0xc8] sm:$0xff]
    %v74 = vld [vmem:[#allocation2 + $0xd0] sm:$0xff]
    %v75 = vld [vmem:[#allocation2 + $0xd8] sm:$0xff]
    %v76 = vld [vmem:[#allocation2 + $0xe0] sm:$0xff]
    %v77 = vld [vmem:[#allocation2 + $0xe8] sm:$0xff]
    %v78 = vld [vmem:[#allocation2 + $0xf0] sm:$0xff]
    %v79 = vld [vmem:[#allocation2 + $0xf8] sm:$0xff]
    %v80 = vpack.c.bf16 %v49, %v48
    %v81 = vpack.c.bf16 %v51, %v50
    %v82 = vpack.c.bf16 %v53, %v52
    %v83 = vpack.c.bf16 %v55, %v54
    %v84 = vpack.c.bf16 %v57, %v56
    %v85 = vpack.c.bf16 %v59, %v58
    %v86 = vpack.c.bf16 %v61, %v60
    %v87 = vpack.c.bf16 %v63, %v62
    %v88 = vpack.c.bf16 %v65, %v64
    %v89 = vpack.c.bf16 %v67, %v66
    %v90 = vpack.c.bf16 %v69, %v68
    %v91 = vpack.c.bf16 %v71, %v70
    %v92 = vpack.c.bf16 %v73, %v72
    %v93 = vpack.c.bf16 %v75, %v74
    %v94 = vpack.c.bf16 %v77, %v76
    %v95 = vpack.c.bf16 %v79, %v78
    %v96 = vld [vmem:[#allocation5] sm:$0xff]
    %v97 = vld [vmem:[#allocation5 + $0x8] sm:$0xff]
    %v98 = vld [vmem:[#allocation5 + $0x10] sm:$0xff]
    %v99 = vld [vmem:[#allocation5 + $0x18] sm:$0xff]
    %v100 = vld [vmem:[#allocation5 + $0x20] sm:$0xff]
    %v101 = vld [vmem:[#allocation5 + $0x28] sm:$0xff]
    %v102 = vld [vmem:[#allocation5 + $0x30] sm:$0xff]
    %v103 = vld [vmem:[#allocation5 + $0x38] sm:$0xff]
    %v104 = vld [vmem:[#allocation5 + $0x40] sm:$0xff]
    %v105 = vld [vmem:[#allocation5 + $0x48] sm:$0xff]
    %v106 = vld [vmem:[#allocation5 + $0x50] sm:$0xff]
    %v107 = vld [vmem:[#allocation5 + $0x58] sm:$0xff]
    %v108 = vld [vmem:[#allocation5 + $0x60] sm:$0xff]
    %v109 = vld [vmem:[#allocation5 + $0x68] sm:$0xff]
    %v110 = vld [vmem:[#allocation5 + $0x70] sm:$0xff]
    %v111 = vld [vmem:[#allocation5 + $0x78] sm:$0xff]
    %v128 = vunpack.c.l.b16 %v96
    %v129 = vunpack.c.h.b16 %v96
    %v130 = vunpack.c.l.b16 %v97
    %v131 = vunpack.c.h.b16 %v97
    %v132 = vunpack.c.l.b16 %v98
    %v133 = vunpack.c.h.b16 %v98
    %v134 = vunpack.c.l.b16 %v99
    %v135 = vunpack.c.h.b16 %v99
    %v136 = vunpack.c.l.b16 %v100
    %v137 = vunpack.c.h.b16 %v100
    %v138 = vunpack.c.l.b16 %v101
    %v139 = vunpack.c.h.b16 %v101
    %v140 = vunpack.c.l.b16 %v102
    %v141 = vunpack.c.h.b16 %v102
    %v142 = vunpack.c.l.b16 %v103
    %v143 = vunpack.c.h.b16 %v103
    %v144 = vunpack.c.l.b16 %v104
    %v145 = vunpack.c.h.b16 %v104
    %v146 = vunpack.c.l.b16 %v105
    %v147 = vunpack.c.h.b16 %v105
    %v148 = vunpack.c.l.b16 %v106
    %v149 = vunpack.c.h.b16 %v106
    %v150 = vunpack.c.l.b16 %v107
    %v151 = vunpack.c.h.b16 %v107
    %v152 = vunpack.c.l.b16 %v108
    %v153 = vunpack.c.h.b16 %v108
    %v154 = vunpack.c.l.b16 %v109
    %v155 = vunpack.c.h.b16 %v109
    %v156 = vunpack.c.l.b16 %v110
    %v157 = vunpack.c.h.b16 %v110
    %v158 = vunpack.c.l.b16 %v111
    %v159 = vunpack.c.h.b16 %v111
    %v160 = vpack.c.b16 %v130, %v128
    %v161 = vpack.c.b16 %v131, %v129
    %v162 = vpack.c.b16 %v134, %v132
    %v163 = vpack.c.b16 %v135, %v133
    %v164 = vpack.c.b16 %v138, %v136
    %v165 = vpack.c.b16 %v139, %v137
    %v166 = vpack.c.b16 %v142, %v140
    %v167 = vpack.c.b16 %v143, %v141
    %v168 = vpack.c.b16 %v146, %v144
    %v169 = vpack.c.b16 %v147, %v145
    %v170 = vpack.c.b16 %v150, %v148
    %v171 = vpack.c.b16 %v151, %v149
    %v172 = vpack.c.b16 %v154, %v152
    %v173 = vpack.c.b16 %v155, %v153
    %v174 = vpack.c.b16 %v158, %v156
    %v175 = vpack.c.b16 %v159, %v157
    %192 = vmatpush.bf16.msra.mxu0 %v174
    %193 = vmatpush.bf16.msra.mxu0 %v172
    %194 = vmatpush.bf16.msra.mxu0 %v170
    %195 = vmatpush.bf16.msra.mxu0 %v168
    %196 = vmatpush.bf16.msra.mxu0 %v166
    %197 = vmatpush.bf16.msra.mxu0 %v164
    %198 = vmatpush.bf16.msra.mxu0 %v162
    %199 = vmatpush.bf16.msra.mxu0 %v160
    %200 = vmatmul.bf16.gmra.mxu0 %v80
    %v201 = vpop.f32.mrf.mxu0
    %v202 = vadd.f32 0.0, %v201
    %v203 = vpop.f32.mrf.mxu0
    %v204 = vadd.f32 0.0, %v203
    %205 = vmatmul.bf16.gmra.mxu0 %v81
    %v206 = vpop.f32.mrf.mxu0
    %v207 = vadd.f32 0.0, %v206
    %v208 = vpop.f32.mrf.mxu0
    %v209 = vadd.f32 0.0, %v208
    %210 = vmatmul.bf16.gmra.mxu0 %v82
    %v211 = vpop.f32.mrf.mxu0
    %v212 = vadd.f32 0.0, %v211
    %v213 = vpop.f32.mrf.mxu0
    %v214 = vadd.f32 0.0, %v213
    %215 = vmatmul.bf16.gmra.mxu0 %v83
    %v216 = vpop.f32.mrf.mxu0
    %v217 = vadd.f32 0.0, %v216
    %v218 = vpop.f32.mrf.mxu0
    %v219 = vadd.f32 0.0, %v218
    %220 = vmatmul.bf16.gmra.mxu0 %v84
    %v221 = vpop.f32.mrf.mxu0
    %v222 = vadd.f32 0.0, %v221
    %v223 = vpop.f32.mrf.mxu0
    %v224 = vadd.f32 0.0, %v223
    %225 = vmatmul.bf16.gmra.mxu0 %v85
    %v226 = vpop.f32.mrf.mxu0
    %v227 = vadd.f32 0.0, %v226
    %v228 = vpop.f32.mrf.mxu0
    %v229 = vadd.f32 0.0, %v228
    %230 = vmatmul.bf16.gmra.mxu0 %v86
    %v231 = vpop.f32.mrf.mxu0
    %v232 = vadd.f32 0.0, %v231
    %v233 = vpop.f32.mrf.mxu0
    %v234 = vadd.f32 0.0, %v233
    %235 = vmatmul.bf16.gmra.mxu0 %v87
    %v236 = vpop.f32.mrf.mxu0
    %v237 = vadd.f32 0.0, %v236
    %v238 = vpop.f32.mrf.mxu0
    %v239 = vadd.f32 0.0, %v238
    %240 = vmatmul.bf16.gmra.mxu0 %v88
    %v241 = vpop.f32.mrf.mxu0
    %v242 = vadd.f32 0.0, %v241
    %v243 = vpop.f32.mrf.mxu0
    %v244 = vadd.f32 0.0, %v243
    %245 = vmatmul.bf16.gmra.mxu0 %v89
    %v246 = vpop.f32.mrf.mxu0
    %v247 = vadd.f32 0.0, %v246
    %v248 = vpop.f32.mrf.mxu0
    %v249 = vadd.f32 0.0, %v248
    %250 = vmatmul.bf16.gmra.mxu0 %v90
    %v251 = vpop.f32.mrf.mxu0
    %v252 = vadd.f32 0.0, %v251
    %v253 = vpop.f32.mrf.mxu0
    %v254 = vadd.f32 0.0, %v253
    %255 = vmatmul.bf16.gmra.mxu0 %v91
    %v256 = vpop.f32.mrf.mxu0
    %v257 = vadd.f32 0.0, %v256
    %v258 = vpop.f32.mrf.mxu0
    %v259 = vadd.f32 0.0, %v258
    %260 = vmatmul.bf16.gmra.mxu0 %v92
    %v261 = vpop.f32.mrf.mxu0
    %v262 = vadd.f32 0.0, %v261
    %v263 = vpop.f32.mrf.mxu0
    %v264 = vadd.f32 0.0, %v263
    %265 = vmatmul.bf16.gmra.mxu0 %v93
    %v266 = vpop.f32.mrf.mxu0
    %v267 = vadd.f32 0.0, %v266
    %v268 = vpop.f32.mrf.mxu0
    %v269 = vadd.f32 0.0, %v268
    %270 = vmatmul.bf16.gmra.mxu0 %v94
    %v271 = vpop.f32.mrf.mxu0
    %v272 = vadd.f32 0.0, %v271
    %v273 = vpop.f32.mrf.mxu0
    %v274 = vadd.f32 0.0, %v273
    %275 = vmatmul.bf16.gmra.mxu0 %v95
    %v276 = vpop.f32.mrf.mxu0
    %v277 = vadd.f32 0.0, %v276
    %v278 = vpop.f32.mrf.mxu0
    %v279 = vadd.f32 0.0, %v278
    %280 = vdwg.mxu0
    %281 = vmatpush.bf16.msra.mxu0 %v175
    %282 = vmatpush.bf16.msra.mxu0 %v173
    %283 = vmatpush.bf16.msra.mxu0 %v171
    %284 = vmatpush.bf16.msra.mxu0 %v169
    %285 = vmatpush.bf16.msra.mxu0 %v167
    %286 = vmatpush.bf16.msra.mxu0 %v165
    %287 = vmatpush.bf16.msra.mxu0 %v163
    %288 = vmatpush.bf16.msra.mxu0 %v161
    %289 = vmatmul.bf16.gmra.mxu0 %v80
    %v290 = vpop.f32.mrf.mxu0
    %v291 = vadd.f32 0.0, %v290
    %v292 = vpop.f32.mrf.mxu0
    %v293 = vadd.f32 0.0, %v292
    %294 = vmatmul.bf16.gmra.mxu0 %v81
    %v295 = vpop.f32.mrf.mxu0
    %v296 = vadd.f32 0.0, %v295
    %v297 = vpop.f32.mrf.mxu0
    %v298 = vadd.f32 0.0, %v297
    %299 = vmatmul.bf16.gmra.mxu0 %v82
    %v300 = vpop.f32.mrf.mxu0
    %v301 = vadd.f32 0.0, %v300
    %v302 = vpop.f32.mrf.mxu0
    %v303 = vadd.f32 0.0, %v302
    %304 = vmatmul.bf16.gmra.mxu0 %v83
    %v305 = vpop.f32.mrf.mxu0
    %v306 = vadd.f32 0.0, %v305
    %v307 = vpop.f32.mrf.mxu0
    %v308 = vadd.f32 0.0, %v307
    %309 = vmatmul.bf16.gmra.mxu0 %v84
    %v310 = vpop.f32.mrf.mxu0
    %v311 = vadd.f32 0.0, %v310
    %v312 = vpop.f32.mrf.mxu0
    %v313 = vadd.f32 0.0, %v312
    %314 = vmatmul.bf16.gmra.mxu0 %v85
    %v315 = vpop.f32.mrf.mxu0
    %v316 = vadd.f32 0.0, %v315
    %v317 = vpop.f32.mrf.mxu0
    %v318 = vadd.f32 0.0, %v317
    %319 = vmatmul.bf16.gmra.mxu0 %v86
    %v320 = vpop.f32.mrf.mxu0
    %v321 = vadd.f32 0.0, %v320
    %v322 = vpop.f32.mrf.mxu0
    %v323 = vadd.f32 0.0, %v322
    %324 = vmatmul.bf16.gmra.mxu0 %v87
    %v325 = vpop.f32.mrf.mxu0
    %v326 = vadd.f32 0.0, %v325
    %v327 = vpop.f32.mrf.mxu0
    %v328 = vadd.f32 0.0, %v327
    %329 = vmatmul.bf16.gmra.mxu0 %v88
    %v330 = vpop.f32.mrf.mxu0
    %v331 = vadd.f32 0.0, %v330
    %v332 = vpop.f32.mrf.mxu0
    %v333 = vadd.f32 0.0, %v332
    %334 = vmatmul.bf16.gmra.mxu0 %v89
    %v335 = vpop.f32.mrf.mxu0
    %v336 = vadd.f32 0.0, %v335
    %v337 = vpop.f32.mrf.mxu0
    %v338 = vadd.f32 0.0, %v337
    %339 = vmatmul.bf16.gmra.mxu0 %v90
    %v340 = vpop.f32.mrf.mxu0
    %v341 = vadd.f32 0.0, %v340
    %v342 = vpop.f32.mrf.mxu0
    %v343 = vadd.f32 0.0, %v342
    %344 = vmatmul.bf16.gmra.mxu0 %v91
    %v345 = vpop.f32.mrf.mxu0
    %v346 = vadd.f32 0.0, %v345
    %v347 = vpop.f32.mrf.mxu0
    %v348 = vadd.f32 0.0, %v347
    %349 = vmatmul.bf16.gmra.mxu0 %v92
    %v350 = vpop.f32.mrf.mxu0
    %v351 = vadd.f32 0.0, %v350
    %v352 = vpop.f32.mrf.mxu0
    %v353 = vadd.f32 0.0, %v352
    %354 = vmatmul.bf16.gmra.mxu0 %v93
    %v355 = vpop.f32.mrf.mxu0
    %v356 = vadd.f32 0.0, %v355
    %v357 = vpop.f32.mrf.mxu0
    %v358 = vadd.f32 0.0, %v357
    %359 = vmatmul.bf16.gmra.mxu0 %v94
    %v360 = vpop.f32.mrf.mxu0
    %v361 = vadd.f32 0.0, %v360
    %v362 = vpop.f32.mrf.mxu0
    %v363 = vadd.f32 0.0, %v362
    %364 = vmatmul.bf16.gmra.mxu0 %v95
    %v365 = vpop.f32.mrf.mxu0
    %v366 = vadd.f32 0.0, %v365
    %v367 = vpop.f32.mrf.mxu0
    %v368 = vadd.f32 0.0, %v367
    %369 = vdwg.mxu0
    %v370 = vpack.c.bf16 %v291, %v202
    %v371 = vpack.c.bf16 %v293, %v204
    %v372 = vpack.c.bf16 %v296, %v207
    %v373 = vpack.c.bf16 %v298, %v209
    %v374 = vpack.c.bf16 %v301, %v212
    %v375 = vpack.c.bf16 %v303, %v214
    %v376 = vpack.c.bf16 %v306, %v217
    %v377 = vpack.c.bf16 %v308, %v219
    %v378 = vpack.c.bf16 %v311, %v222
    %v379 = vpack.c.bf16 %v313, %v224
    %v380 = vpack.c.bf16 %v316, %v227
    %v381 = vpack.c.bf16 %v318, %v229
    %v382 = vpack.c.bf16 %v321, %v232
    %v383 = vpack.c.bf16 %v323, %v234
    %v384 = vpack.c.bf16 %v326, %v237
    %v385 = vpack.c.bf16 %v328, %v239
    %v386 = vpack.c.bf16 %v331, %v242
    %v387 = vpack.c.bf16 %v333, %v244
    %v388 = vpack.c.bf16 %v336, %v247
    %v389 = vpack.c.bf16 %v338, %v249
    %v390 = vpack.c.bf16 %v341, %v252
    %v391 = vpack.c.bf16 %v343, %v254
    %v392 = vpack.c.bf16 %v346, %v257
    %v393 = vpack.c.bf16 %v348, %v259
    %v394 = vpack.c.bf16 %v351, %v262
    %v395 = vpack.c.bf16 %v353, %v264
    %v396 = vpack.c.bf16 %v356, %v267
    %v397 = vpack.c.bf16 %v358, %v269
    %v398 = vpack.c.bf16 %v361, %v272
    %v399 = vpack.c.bf16 %v363, %v274
    %v400 = vpack.c.bf16 %v366, %v277
    %v401 = vpack.c.bf16 %v368, %v279
    %402 = vst [vmem:[#allocation7] sm:$0xff] %v370
    %403 = vst [vmem:[#allocation7 + $0x8] sm:$0xff] %v371
    %404 = vst [vmem:[#allocation7 + $0x10] sm:$0xff] %v372
    %405 = vst [vmem:[#allocation7 + $0x18] sm:$0xff] %v373
    %406 = vst [vmem:[#allocation7 + $0x20] sm:$0xff] %v374
    %407 = vst [vmem:[#allocation7 + $0x28] sm:$0xff] %v375
    %408 = vst [vmem:[#allocation7 + $0x30] sm:$0xff] %v376
    %409 = vst [vmem:[#allocation7 + $0x38] sm:$0xff] %v377
    %410 = vst [vmem:[#allocation7 + $0x40] sm:$0xff] %v378
    %411 = vst [vmem:[#allocation7 + $0x48] sm:$0xff] %v379
    %412 = vst [vmem:[#allocation7 + $0x50] sm:$0xff] %v380
    %413 = vst [vmem:[#allocation7 + $0x58] sm:$0xff] %v381
    %414 = vst [vmem:[#allocation7 + $0x60] sm:$0xff] %v382
    %415 = vst [vmem:[#allocation7 + $0x68] sm:$0xff] %v383
    %416 = vst [vmem:[#allocation7 + $0x70] sm:$0xff] %v384
    %417 = vst [vmem:[#allocation7 + $0x78] sm:$0xff] %v385
    %418 = vst [vmem:[#allocation7 + $0x80] sm:$0xff] %v386
    %419 = vst [vmem:[#allocation7 + $0x88] sm:$0xff] %v387
    %420 = vst [vmem:[#allocation7 + $0x90] sm:$0xff] %v388
    %421 = vst [vmem:[#allocation7 + $0x98] sm:$0xff] %v389
    %422 = vst [vmem:[#allocation7 + $0xa0] sm:$0xff] %v390
    %423 = vst [vmem:[#allocation7 + $0xa8] sm:$0xff] %v391
    %424 = vst [vmem:[#allocation7 + $0xb0] sm:$0xff] %v392
    %425 = vst [vmem:[#allocation7 + $0xb8] sm:$0xff] %v393
    %426 = vst [vmem:[#allocation7 + $0xc0] sm:$0xff] %v394
    %427 = vst [vmem:[#allocation7 + $0xc8] sm:$0xff] %v395
    %428 = vst [vmem:[#allocation7 + $0xd0] sm:$0xff] %v396
    %429 = vst [vmem:[#allocation7 + $0xd8] sm:$0xff] %v397
    %430 = vst [vmem:[#allocation7 + $0xe0] sm:$0xff] %v398
    %431 = vst [vmem:[#allocation7 + $0xe8] sm:$0xff] %v399
    %432 = vst [vmem:[#allocation7 + $0xf0] sm:$0xff] %v400
    %433 = vst [vmem:[#allocation7 + $0xf8] sm:$0xff] %v401
    %v434 = vadd.f32 %v202, %v204
    %v435 = vadd.f32 %v434, %v207
    %v436 = vadd.f32 %v435, %v209
    %v437 = vadd.f32 %v436, %v212
    %v438 = vadd.f32 %v437, %v214
    %v439 = vadd.f32 %v438, %v217
    %v440 = vadd.f32 %v439, %v219
    %v441 = vadd.f32 %v440, %v222
    %v442 = vadd.f32 %v441, %v224
    %v443 = vadd.f32 %v442, %v227
    %v444 = vadd.f32 %v443, %v229
    %v445 = vadd.f32 %v444, %v232
    %v446 = vadd.f32 %v445, %v234
    %v447 = vadd.f32 %v446, %v237
    %v448 = vadd.f32 %v447, %v239
    %v449 = vadd.f32 %v448, %v242
    %v450 = vadd.f32 %v449, %v244
    %v451 = vadd.f32 %v450, %v247
    %v452 = vadd.f32 %v451, %v249
    %v453 = vadd.f32 %v452, %v252
    %v454 = vadd.f32 %v453, %v254
    %v455 = vadd.f32 %v454, %v257
    %v456 = vadd.f32 %v455, %v259
    %v457 = vadd.f32 %v456, %v262
    %v458 = vadd.f32 %v457, %v264
    %v459 = vadd.f32 %v458, %v267
    %v460 = vadd.f32 %v459, %v269
    %v461 = vadd.f32 %v460, %v272
    %v462 = vadd.f32 %v461, %v274
    %v463 = vadd.f32 %v462, %v277
    %v464 = vadd.f32 %v463, %v279
    %v465 = vrot.slane %v464, 4
    %v466 = vadd.f32 %v464, %v465
    %v467 = vrot.slane %v466, 2
    %v468 = vadd.f32 %v466, %v467
    %v469 = vrot.slane %v468, 1
    %v470 = vadd.f32 %v468, %v469
    %v471 = vadd.f32 %v291, %v293
    %v472 = vadd.f32 %v471, %v296
    %v473 = vadd.f32 %v472, %v298
    %v474 = vadd.f32 %v473, %v301
    %v475 = vadd.f32 %v474, %v303
    %v476 = vadd.f32 %v475, %v306
    %v477 = vadd.f32 %v476, %v308
    %v478 = vadd.f32 %v477, %v311
    %v479 = vadd.f32 %v478, %v313
    %v480 = vadd.f32 %v479, %v316
    %v481 = vadd.f32 %v480, %v318
    %v482 = vadd.f32 %v481, %v321
    %v483 = vadd.f32 %v482, %v323
    %v484 = vadd.f32 %v483, %v326
    %v485 = vadd.f32 %v484, %v328
    %v486 = vadd.f32 %v485, %v331
    %v487 = vadd.f32 %v486, %v333
    %v488 = vadd.f32 %v487, %v336
    %v489 = vadd.f32 %v488, %v338
    %v490 = vadd.f32 %v489, %v341
    %v491 = vadd.f32 %v490, %v343
    %v492 = vadd.f32 %v491, %v346
    %v493 = vadd.f32 %v492, %v348
    %v494 = vadd.f32 %v493, %v351
    %v495 = vadd.f32 %v494, %v353
    %v496 = vadd.f32 %v495, %v356
    %v497 = vadd.f32 %v496, %v358
    %v498 = vadd.f32 %v497, %v361
    %v499 = vadd.f32 %v498, %v363
    %v500 = vadd.f32 %v499, %v366
    %v501 = vadd.f32 %v500, %v368
    %v502 = vrot.slane %v501, 4
    %v503 = vadd.f32 %v501, %v502
    %v504 = vrot.slane %v503, 2
    %v505 = vadd.f32 %v503, %v504
    %v506 = vrot.slane %v505, 1
    %v507 = vadd.f32 %v505, %v506
    %v510 = vrot.slane %v507, 7
    %vm511 = vcmask 1040384
    %v512 = vsel %vm511, %v470, %v510
    %v514 = vlaneseq
    %vm515 = vcmp.ge.s32.totalorder %v514, 0
    %vm516 = vcmp.lt.s32.totalorder %v514, 256
    %vm517 = vmand %vm515, %vm516
    %518 = vst.msk [vmem:[#allocation8] sm:$0x3] %vm517, %v512
    %v519 = vmul.f32 %v202, %v202
    %v520 = vmul.f32 %v291, %v291
    %v521 = vmul.f32 %v204, %v204
    %v522 = vmul.f32 %v293, %v293
    %v523 = vmul.f32 %v207, %v207
    %v524 = vmul.f32 %v296, %v296
    %v525 = vmul.f32 %v209, %v209
    %v526 = vmul.f32 %v298, %v298
    %v527 = vmul.f32 %v212, %v212
    %v528 = vmul.f32 %v301, %v301
    %v529 = vmul.f32 %v214, %v214
    %v530 = vmul.f32 %v303, %v303
    %v531 = vmul.f32 %v217, %v217
    %v532 = vmul.f32 %v306, %v306
    %v533 = vmul.f32 %v219, %v219
    %v534 = vmul.f32 %v308, %v308
    %v535 = vmul.f32 %v222, %v222
    %v536 = vmul.f32 %v311, %v311
    %v537 = vmul.f32 %v224, %v224
    %v538 = vmul.f32 %v313, %v313
    %v539 = vmul.f32 %v227, %v227
    %v540 = vmul.f32 %v316, %v316
    %v541 = vmul.f32 %v229, %v229
    %v542 = vmul.f32 %v318, %v318
    %v543 = vmul.f32 %v232, %v232
    %v544 = vmul.f32 %v321, %v321
    %v545 = vmul.f32 %v234, %v234
    %v546 = vmul.f32 %v323, %v323
    %v547 = vmul.f32 %v237, %v237
    %v548 = vmul.f32 %v326, %v326
    %v549 = vmul.f32 %v239, %v239
    %v550 = vmul.f32 %v328, %v328
    %v551 = vmul.f32 %v242, %v242
    %v552 = vmul.f32 %v331, %v331
    %v553 = vmul.f32 %v244, %v244
    %v554 = vmul.f32 %v333, %v333
    %v555 = vmul.f32 %v247, %v247
    %v556 = vmul.f32 %v336, %v336
    %v557 = vmul.f32 %v249, %v249
    %v558 = vmul.f32 %v338, %v338
    %v559 = vmul.f32 %v252, %v252
    %v560 = vmul.f32 %v341, %v341
    %v561 = vmul.f32 %v254, %v254
    %v562 = vmul.f32 %v343, %v343
    %v563 = vmul.f32 %v257, %v257
    %v564 = vmul.f32 %v346, %v346
    %v565 = vmul.f32 %v259, %v259
    %v566 = vmul.f32 %v348, %v348
    %v567 = vmul.f32 %v262, %v262
    %v568 = vmul.f32 %v351, %v351
    %v569 = vmul.f32 %v264, %v264
    %v570 = vmul.f32 %v353, %v353
    %v571 = vmul.f32 %v267, %v267
    %v572 = vmul.f32 %v356, %v356
    %v573 = vmul.f32 %v269, %v269
    %v574 = vmul.f32 %v358, %v358
    %v575 = vmul.f32 %v272, %v272
    %v576 = vmul.f32 %v361, %v361
    %v577 = vmul.f32 %v274, %v274
    %v578 = vmul.f32 %v363, %v363
    %v579 = vmul.f32 %v277, %v277
    %v580 = vmul.f32 %v366, %v366
    %v581 = vmul.f32 %v279, %v279
    %v582 = vmul.f32 %v368, %v368
    %v583 = vadd.f32 %v519, %v521
    %v584 = vadd.f32 %v583, %v523
    %v585 = vadd.f32 %v584, %v525
    %v586 = vadd.f32 %v585, %v527
    %v587 = vadd.f32 %v586, %v529
    %v588 = vadd.f32 %v587, %v531
    %v589 = vadd.f32 %v588, %v533
    %v590 = vadd.f32 %v589, %v535
    %v591 = vadd.f32 %v590, %v537
    %v592 = vadd.f32 %v591, %v539
    %v593 = vadd.f32 %v592, %v541
    %v594 = vadd.f32 %v593, %v543
    %v595 = vadd.f32 %v594, %v545
    %v596 = vadd.f32 %v595, %v547
    %v597 = vadd.f32 %v596, %v549
    %v598 = vadd.f32 %v597, %v551
    %v599 = vadd.f32 %v598, %v553
    %v600 = vadd.f32 %v599, %v555
    %v601 = vadd.f32 %v600, %v557
    %v602 = vadd.f32 %v601, %v559
    %v603 = vadd.f32 %v602, %v561
    %v604 = vadd.f32 %v603, %v563
    %v605 = vadd.f32 %v604, %v565
    %v606 = vadd.f32 %v605, %v567
    %v607 = vadd.f32 %v606, %v569
    %v608 = vadd.f32 %v607, %v571
    %v609 = vadd.f32 %v608, %v573
    %v610 = vadd.f32 %v609, %v575
    %v611 = vadd.f32 %v610, %v577
    %v612 = vadd.f32 %v611, %v579
    %v613 = vadd.f32 %v612, %v581
    %v614 = vrot.slane %v613, 4
    %v615 = vadd.f32 %v613, %v614
    %v616 = vrot.slane %v615, 2
    %v617 = vadd.f32 %v615, %v616
    %v618 = vrot.slane %v617, 1
    %v619 = vadd.f32 %v617, %v618
    %v620 = vadd.f32 %v520, %v522
    %v621 = vadd.f32 %v620, %v524
    %v622 = vadd.f32 %v621, %v526
    %v623 = vadd.f32 %v622, %v528
    %v624 = vadd.f32 %v623, %v530
    %v625 = vadd.f32 %v624, %v532
    %v626 = vadd.f32 %v625, %v534
    %v627 = vadd.f32 %v626, %v536
    %v628 = vadd.f32 %v627, %v538
    %v629 = vadd.f32 %v628, %v540
    %v630 = vadd.f32 %v629, %v542
    %v631 = vadd.f32 %v630, %v544
    %v632 = vadd.f32 %v631, %v546
    %v633 = vadd.f32 %v632, %v548
    %v634 = vadd.f32 %v633, %v550
    %v635 = vadd.f32 %v634, %v552
    %v636 = vadd.f32 %v635, %v554
    %v637 = vadd.f32 %v636, %v556
    %v638 = vadd.f32 %v637, %v558
    %v639 = vadd.f32 %v638, %v560
    %v640 = vadd.f32 %v639, %v562
    %v641 = vadd.f32 %v640, %v564
    %v642 = vadd.f32 %v641, %v566
    %v643 = vadd.f32 %v642, %v568
    %v644 = vadd.f32 %v643, %v570
    %v645 = vadd.f32 %v644, %v572
    %v646 = vadd.f32 %v645, %v574
    %v647 = vadd.f32 %v646, %v576
    %v648 = vadd.f32 %v647, %v578
    %v649 = vadd.f32 %v648, %v580
    %v650 = vadd.f32 %v649, %v582
    %v651 = vrot.slane %v650, 4
    %v652 = vadd.f32 %v650, %v651
    %v653 = vrot.slane %v652, 2
    %v654 = vadd.f32 %v652, %v653
    %v655 = vrot.slane %v654, 1
    %v656 = vadd.f32 %v654, %v655
    %v659 = vrot.slane %v656, 7
    %v660 = vsel %vm511, %v619, %v659
    %662 = vst.msk [vmem:[#allocation10] sm:$0x3] %vm517, %v660
    // Predicated region
    $region18: #{tpu_custom_call.1} parent=1 // pred_check
      _
    $region19: #{tpu_custom_call.1} parent=1 // pred_check_branch
      %664 = sbr.rel (0) target = $region21
    $region20: #{tpu_custom_call.1} parent=1 // pred_region
      %666 = vsyncadd [#allocation4], 0
      %s667 = sshll.u32 [#allocation7], 4
      %s668 = int_to_ptr.vmem [resolvable:$true] %s667
      %s669 = sshll.u32 %s2, 4
      %s670 = int_to_ptr.hbm [resolvable:$true] %s669
      %675 = dma.vmem_to_hbm [thread:$0]  %s668, 4096, %s670, [#allocation4], 128, 128, 8
    $region21: #{tpu_custom_call.1} parent=1 // pred_fallthru
      _
    // Predicated region
    $region22: #{tpu_custom_call.1} parent=1 // pred_check
      _
    $region23: #{tpu_custom_call.1} parent=1 // pred_check_branch
      %677 = sbr.rel (0) target = $region25
    $region24: #{tpu_custom_call.1} parent=1 // pred_region
      %679 = vsyncadd [#allocation9], 0
      %s681 = sshll.u32 [#allocation8], 4
      %s682 = int_to_ptr.vmem [resolvable:$true] %s681
      %s683 = sshll.u32 %s3, 4
      %s684 = int_to_ptr.hbm [resolvable:$true] %s683
      %686 = dma.vmem_to_hbm [thread:$0]  %s682, 32, %s684, [#allocation9]
    $region25: #{tpu_custom_call.1} parent=1 // pred_fallthru
      _
    // Predicated region
    $region26: #{tpu_custom_call.1} parent=1 // pred_check
      _
    $region27: #{tpu_custom_call.1} parent=1 // pred_check_branch
      %688 = sbr.rel (0) target = $region29
    $region28: #{tpu_custom_call.1} parent=1 // pred_region
      %690 = vsyncadd [#allocation9], 0
      %s692 = sshll.u32 [#allocation10], 4
      %s693 = int_to_ptr.vmem [resolvable:$true] %s692
      %s694 = sshll.u32 %s4, 4
      %s695 = int_to_ptr.hbm [resolvable:$true] %s694
      %697 = dma.vmem_to_hbm [thread:$0]  %s693, 32, %s695, [#allocation9]
    $region29: #{tpu_custom_call.1} parent=1 // pred_fallthru
      _
    // Predicated region
    $region30: #{tpu_custom_call.1} parent=1 // pred_check
      _
    $region31: #{tpu_custom_call.1} parent=1 // pred_check_branch
      %699 = sbr.rel (0) target = $region33
    $region32: #{tpu_custom_call.1} parent=1 // pred_region
      %701 = dma.done [#allocation4], 4096
    $region33: #{tpu_custom_call.1} parent=1 // pred_fallthru
      _
    // Predicated region
    $region34: #{tpu_custom_call.1} parent=1 // pred_check
      _
    $region35: #{tpu_custom_call.1} parent=1 // pred_check_branch
      %703 = sbr.rel (0) target = $region37
    $region36: #{tpu_custom_call.1} parent=1 // pred_region
      %705 = dma.done [#allocation9], 32
    $region37: #{tpu_custom_call.1} parent=1 // pred_fallthru
      _
    // Predicated region
    $region38: #{tpu_custom_call.1} parent=1 // pred_check
      _
    $region39: #{tpu_custom_call.1} parent=1 // pred_check_branch
      %707 = sbr.rel (0) target = $region41
    $region40: #{tpu_custom_call.1} parent=1 // pred_region
      %709 = dma.done [#allocation9], 32
    $region41: #{tpu_custom_call.1} parent=1 // pred_fallthru
      _
    %710 = vsyncpa [#allocation3], 1
    %711 = vsyncpa [#allocation6], 1
    %712 = vsyncpa [#allocation4], 1
    %713 = vsyncpa [#allocation9], 1

</llo_original>
